<compile_context>
chip_gen: v6e
topology: v6e:2x2x1
jax: 0.10.0
libtpu: 0.0.40
codegen_flags: <defaults>
</compile_context>

<pallas_src>
import math

import jax
import jax.numpy as jnp
from jax.experimental import pallas as pl
from jax.experimental.pallas import tpu as pltpu


HIDDEN = 512
USE_BF16_MXU = True  # bf16 MXU inputs, f32 accumulation (preferred_element_type)


def _quantile_kernel(se_ref, tau_ref, w1_ref, w2_ref, b2_ref, out_ref):
    # se_ref : (TB, 1, Ek)   state embeddings (+ constant-1 column)
    # tau_ref: (TB, N, Ek)   tau embeddings  (+ constant-1 column)
    # w1_ref : (Ek, H) bf16  first Linear's weight with b1 folded in as last row
    # w2_ref : (H, 128) bf16 second Linear's weight in lane 0, zeros elsewhere
    # b2_ref : (1,) f32      scalar in SMEM
    # out_ref: (1, TB*N) f32 lane-dense output slab
    tb, n, ek = tau_ref.shape

    # Broadcast multiply (VPU) + flatten to (tile_m, Ek) rows inside the kernel
    # (N is kept a multiple of 8 so this reshape is a free relayout).
    emb = (se_ref[...] * tau_ref[...]).reshape(tb * n, ek)

    # Linear(E -> H) + ReLU; bias arrives via the constant-1 column, so no
    # per-row VPU bias add. One big-M matmul on the MXU, f32 accumulation.
    h = jnp.dot(emb.astype(w1_ref.dtype), w1_ref[...],
                preferred_element_type=jnp.float32)        # (tile_m, H)
    h = jnp.maximum(h, 0.0)

    # Linear(H -> 1) also on the MXU (K=512): w2 lives in lane 0 of w2_ref.
    q128 = jnp.dot(h.astype(w2_ref.dtype), w2_ref[...],
                   preferred_element_type=jnp.float32)     # (tile_m, 128)
    q = q128[:, 0] + b2_ref[0]                             # (tile_m,)

    out_ref[...] = q[None, :].astype(out_ref.dtype)        # (1, tile_m) lane-dense


def _pick_tiling(batch, n, max_rows=2048):
    """Return (tile_b, padded_batch, num_tiles) with tile_b * n a multiple of 128.

    tile_b is chosen so every grid step writes a 128-lane-aligned output slab,
    per-step work is capped at ~max_rows flattened rows (keeps the (tile_m, 512)
    f32 hidden intermediate small on v7x's 64 MiB VMEM), and the grid has >= 2
    steps when there is enough work (megacore on v7x).
    """
    unit = 128 // math.gcd(n, 128)          # smallest batch chunk with 128-aligned rows
    units_needed = -(-batch // unit)        # ceil
    max_units = max(1, max_rows // (unit * n))
    if units_needed <= 1:
        tile_units = 1
    elif units_needed <= max_units:
        tile_units = min(max_units, -(-units_needed // 2))   # aim for >=2 grid steps
    else:
        tile_units = max_units
    tile_b = max(1, tile_units) * unit
    b_pad = -(-batch // tile_b) * tile_b
    return tile_b, b_pad, b_pad // tile_b


def quantile_network_forward(z, action, tau_embeddings, params):
    """z: (B, Z), action: (B, A), tau_embeddings: (B, N, E) with E = A + Z."""
    w1, b1, w2, b2 = params
    state_emb = jnp.concatenate([z, action], axis=1)          # (B, E)
    B, E = state_emb.shape
    N = tau_embeddings.shape[1]
    assert tau_embeddings.shape == (B, N, E)
    H = w1.shape[1]

    # Fold b1 into W1: constant-1 column on se/tau (so emb gets a 1.0 column)
    # and b1 as an extra row of W1.  K: E -> E+1.
    se_aug = jnp.concatenate(
        [state_emb, jnp.ones((B, 1), state_emb.dtype)], axis=1)          # (B, E+1)
    tau_aug = jnp.concatenate(
        [tau_embeddings, jnp.ones((B, N, 1), tau_embeddings.dtype)], axis=2)
    Ek = E + 1
    w1_aug = jnp.concatenate([w1, b1.reshape(1, H)], axis=0)             # (E+1, H)

    # Pad the batch so every row tile (and the output slab) is 128-lane aligned.
    tile_b, b_pad, num_tiles = _pick_tiling(B, N)
    tile_m = tile_b * N
    m_pad = b_pad * N
    if b_pad != B:
        se_aug = jnp.pad(se_aug, ((0, b_pad - B), (0, 0)))
        tau_aug = jnp.pad(tau_aug, ((0, b_pad - B), (0, 0), (0, 0)))

    se3 = se_aug.reshape(b_pad, 1, Ek).astype(jnp.float32)    # (B_pad, 1, Ek)
    tau3 = tau_aug.astype(jnp.float32)                        # (B_pad, N, Ek)
    mxu_dtype = jnp.bfloat16 if USE_BF16_MXU else jnp.float32
    w1_k = w1_aug.astype(mxu_dtype)                           # (Ek, H)
    # H->1 projection on the MXU: w2 in lane 0 of an (H, 128) matrix.
    w2_k = jnp.zeros((H, 128), jnp.float32).at[:, 0].set(
        w2.reshape(H)).astype(mxu_dtype)                      # (H, 128)
    b2_1d = b2.reshape(1).astype(jnp.float32)

    out_flat = pl.pallas_call(
        _quantile_kernel,
        out_shape=jax.ShapeDtypeStruct((1, m_pad), jnp.float32),
        grid_spec=pltpu.PrefetchScalarGridSpec(
            num_scalar_prefetch=0,
            grid=(num_tiles,),
            in_specs=[
                pl.BlockSpec((tile_b, 1, Ek), lambda t: (t, 0, 0)),   # state emb
                pl.BlockSpec((tile_b, N, Ek), lambda t: (t, 0, 0)),   # tau emb
                pl.BlockSpec((Ek, H), lambda t: (0, 0)),              # W1 (+b1 row)
                pl.BlockSpec((H, 128), lambda t: (0, 0)),             # W2 (lane 0)
                pl.BlockSpec(memory_space=pltpu.MemorySpace.SMEM),    # b2 scalar
            ],
            out_specs=pl.BlockSpec((1, tile_m), lambda t: (0, t)),
        ),
        compiler_params=pltpu.CompilerParams(
            dimension_semantics=("parallel",),
            vmem_limit_bytes=48 * 1024 * 1024),
    )(se3, tau3, w1_k, w2_k, b2_1d)

    # Slice off the padded lanes (they hold q for zero rows), then reshape.
    return out_flat[0, : B * N].reshape(B, N, 1)              # (B, N, 1)


def init_params(key, embedding_dim):
    # Deterministic synthetic init (the original uses initialize_weight; the
    # exact init scheme is irrelevant for kernel semantics).
    k1, k2 = jax.random.split(key)
    w1 = jax.random.normal(k1, (embedding_dim, HIDDEN), jnp.float32) * (
        1.0 / jnp.sqrt(embedding_dim))
    b1 = jnp.zeros((HIDDEN,), jnp.float32)
    w2 = jax.random.normal(k2, (HIDDEN, 1), jnp.float32) * (1.0 / jnp.sqrt(HIDDEN))
    b2 = jnp.zeros((1,), jnp.float32)
    return w1, b1, w2, b2


def _reference(z, action, tau_embeddings, params):
    w1, b1, w2, b2 = params
    se = jnp.concatenate([z, action], axis=1)                 # (B, E)
    emb = se[:, None, :] * tau_embeddings                     # (B, N, E)
    B, N, E = emb.shape
    x = emb.reshape(B * N, E)
    h = jnp.maximum(x @ w1 + b1, 0.0)
    q = h @ w2 + b2
    return q.reshape(B, N, 1)


if __name__ == "__main__":
    key = jax.random.PRNGKey(0)
    kz, ka, kt, kp = jax.random.split(key, 4)

    # Small shapes consistent with the module: action_dim=4, z1_dim=16, z2_dim=12
    B, N = 2, 8
    action_dim, z1_dim, z2_dim = 4, 16, 12
    E = action_dim + z1_dim + z2_dim                          # 32

    z = jax.random.normal(kz, (B, z1_dim + z2_dim), jnp.float32)
    action = jax.random.normal(ka, (B, action_dim), jnp.float32)
    tau_embeddings = jax.random.normal(kt, (B, N, E), jnp.float32)
    params = init_params(kp, E)

    out = quantile_network_forward(z, action, tau_embeddings, params)
    out = jax.block_until_ready(out)

    ref = _reference(z, action, tau_embeddings, params)
    assert out.shape == (B, N, 1)
    # Both matmuls feed bf16 inputs to the MXU (f32 accumulation), so allow a
    # small tolerance vs the pure-f32 reference — much tighter than before.
    assert jnp.allclose(out, ref, atol=2e-2, rtol=2e-2), "mismatch vs reference"

    print("KERNEL_OK")
</pallas_src>

<mosaic_0001>
module attributes {stable_mosaic.version = 11 : i64} {
  func.func @_quantile_kernel(%arg0: i32, %arg1: memref<16x1x33xf32, #tpu.memory_space<vmem>>, %arg2: memref<16x8x33xf32, #tpu.memory_space<vmem>>, %arg3: memref<33x512xbf16, #tpu.memory_space<vmem>>, %arg4: memref<512x128xbf16, #tpu.memory_space<vmem>>, %arg5: memref<1xf32, #tpu.memory_space<smem>>, %arg6: memref<1x128xf32, #tpu.memory_space<vmem>>) attributes {dimension_semantics = [#tpu.dimension_semantics<parallel>], iteration_bounds = array<i64: 1>, scalar_prefetch = 0 : i64, scratch_operands = 0 : i64, tpu.core_type = #tpu.core_type<tc>, window_params = [{transform_indices = @transform_0, window_bounds = array<i64: 16, 1, 33>}, {transform_indices = @transform_1, window_bounds = array<i64: 16, 8, 33>}, {pipeline_mode = #tpu.pipeline_mode<synchronous>, transform_indices = @transform_2, window_bounds = array<i64: 33, 512>}, {pipeline_mode = #tpu.pipeline_mode<synchronous>, transform_indices = @transform_3, window_bounds = array<i64: 512, 128>}, {transform_indices = @transform_4, window_bounds = array<i64: 1>}, {transform_indices = @transform_5, window_bounds = array<i64: 1, 128>}]} {
    %c0 = arith.constant 0 : index
    %c0_0 = arith.constant 0 : index
    %c0_1 = arith.constant 0 : index
    %0 = vector.load %arg1[%c0, %c0_0, %c0_1] : memref<16x1x33xf32, #tpu.memory_space<vmem>>, vector<16x1x33xf32>
    %c0_2 = arith.constant 0 : index
    %c0_3 = arith.constant 0 : index
    %c0_4 = arith.constant 0 : index
    %1 = vector.load %arg2[%c0_2, %c0_3, %c0_4] : memref<16x8x33xf32, #tpu.memory_space<vmem>>, vector<16x8x33xf32>
    %2 = vector.broadcast %0 : vector<16x1x33xf32> to vector<16x8x33xf32>
    %3 = arith.mulf %2, %1 : vector<16x8x33xf32>
    %4 = vector.shape_cast %3 : vector<16x8x33xf32> to vector<128x33xf32>
    %5 = arith.truncf %4 : vector<128x33xf32> to vector<128x33xbf16>
    %c0_5 = arith.constant 0 : index
    %c0_6 = arith.constant 0 : index
    %6 = vector.load %arg3[%c0_5, %c0_6] : memref<33x512xbf16, #tpu.memory_space<vmem>>, vector<33x512xbf16>
    %cst = arith.constant dense<0.000000e+00> : vector<128x512xf32>
    %7 = tpu.matmul %5, %6, %cst {dimension_numbers = #tpu.dot_dimension_numbers<[1], [0], [0], [1], [0, 0, 1, 1], [], []>} : vector<128x33xbf16>, vector<33x512xbf16>, vector<128x512xf32> -> vector<128x512xf32>
    %cst_7 = arith.constant 0.000000e+00 : f32
    %8 = vector.broadcast %cst_7 : f32 to vector<128x512xf32>
    %9 = arith.maximumf %7, %8 : vector<128x512xf32>
    %10 = arith.truncf %9 : vector<128x512xf32> to vector<128x512xbf16>
    %c0_8 = arith.constant 0 : index
    %c0_9 = arith.constant 0 : index
    %11 = vector.load %arg4[%c0_8, %c0_9] : memref<512x128xbf16, #tpu.memory_space<vmem>>, vector<512x128xbf16>
    %cst_10 = arith.constant dense<0.000000e+00> : vector<128x128xf32>
    %12 = tpu.matmul %10, %11, %cst_10 {dimension_numbers = #tpu.dot_dimension_numbers<[1], [0], [0], [1], [0, 0, 1, 1], [], []>} : vector<128x512xbf16>, vector<512x128xbf16>, vector<128x128xf32> -> vector<128x128xf32>
    %13 = vector.extract_strided_slice %12 {offsets = [0, 0], sizes = [128, 1], strides = [1, 1]} : vector<128x128xf32> to vector<128x1xf32>
    %14 = vector.shape_cast %13 : vector<128x1xf32> to vector<128xf32>
    %c0_11 = arith.constant 0 : index
    %15 = memref.load %arg5[%c0_11] : memref<1xf32, #tpu.memory_space<smem>>
    %16 = vector.broadcast %15 : f32 to vector<128xf32>
    %17 = arith.addf %14, %16 : vector<128xf32>
    %18 = vector.shape_cast %17 : vector<128xf32> to vector<1x128xf32>
    %c0_12 = arith.constant 0 : index
    %c0_13 = arith.constant 0 : index
    %19 = vector.load %arg6[%c0_12, %c0_13] : memref<1x128xf32, #tpu.memory_space<vmem>>, vector<1x128xf32>
    tpu.vector_store %arg6[%c0_12, %c0_13], %18 {strides = array<i32>} : memref<1x128xf32, #tpu.memory_space<vmem>>, vector<1x128xf32>,
    return
  }
  func.func @transform_0(%arg0: i32) -> (i32, i32, i32) {
    %c0_i32 = arith.constant 0 : i32
    %c0_i32_0 = arith.constant 0 : i32
    %c0_i32_1 = arith.constant 0 : i32
    return %arg0, %c0_i32, %c0_i32_0 : i32, i32, i32
  }
  func.func @transform_1(%arg0: i32) -> (i32, i32, i32) {
    %c0_i32 = arith.constant 0 : i32
    %c0_i32_0 = arith.constant 0 : i32
    %c0_i32_1 = arith.constant 0 : i32
    return %arg0, %c0_i32, %c0_i32_0 : i32, i32, i32
  }
  func.func @transform_2(%arg0: i32) -> (i32, i32) {
    %c0_i32 = arith.constant 0 : i32
    %c0_i32_0 = arith.constant 0 : i32
    %c0_i32_1 = arith.constant 0 : i32
    return %c0_i32, %c0_i32_0 : i32, i32
  }
  func.func @transform_3(%arg0: i32) -> (i32, i32) {
    %c0_i32 = arith.constant 0 : i32
    %c0_i32_0 = arith.constant 0 : i32
    %c0_i32_1 = arith.constant 0 : i32
    return %c0_i32, %c0_i32_0 : i32, i32
  }
  func.func @transform_4(%arg0: i32) -> i32 {
    %c0_i32 = arith.constant 0 : i32
    %c0_i32_0 = arith.constant 0 : i32
    return %c0_i32 : i32
  }
  func.func @transform_5(%arg0: i32) -> (i32, i32) {
    %c0_i32 = arith.constant 0 : i32
    %c0_i32_0 = arith.constant 0 : i32
    return %c0_i32, %arg0 : i32, i32
  }
}

</mosaic_0001>

<llo_original>
// kernel: tpu_custom_call.1
$region0: #{tpu_custom_call.1}
  #allocation0 [shape = 'u32[]', space=smem, size = 0x4, offset = 0x4, fixed_abs, tag = 'smem constant byte address 0x4 - core index']
  #allocation1 [shape = 'u32[144,128]{1,0:T(1,128)}', space=vmem, size = 0x12000, scoped, tag = 'internal scratch']
  #allocation2 [shape = 'f32[1]{0:T(128)S(6)}', space=smem, size = 0x200, scoped, tag = 'scoped memory for tpu_custom_call.1']
  %s0 = inlined_call_operand.hbm [shape: f32[16,1,33], index: 0, kind: input, shape index: {}]
  %s1 = inlined_call_operand.hbm [shape: f32[16,8,33], index: 1, kind: input, shape index: {}]
  %s2 = inlined_call_operand.hbm [shape: bf16[33,512], index: 2, kind: input, shape index: {}]
  %s3 = inlined_call_operand.hbm [shape: bf16[512,128], index: 3, kind: input, shape index: {}]
  %s4 = inlined_call_operand.<no memory space> [shape: f32[1], index: 4, kind: input, shape index: {}]
  %s5 = inlined_call_operand.hbm [shape: f32[1,128], index: 5, kind: output, shape index: {}]
  %s6 = sld [smem:[#allocation0]]
  $region46: #{tpu_custom_call.1} parent=0
    _
  %s8 = ssub.s32 1, %s6
  %s9 = scalar_select 0, %s8, %s6
  %10 = sst [smem:[#allocation2]] %s4
  $region1: #{tpu_custom_call.1} parent=0
    #allocation3 [shape = 'u8[8192]{0}', space=vmem, size = 0x2000, scoped, tag = 'input window, operand 0, single buffered']
    #allocation4 [shape = 's32[1]{0}', space=sflag, size = 0x4, scoped, tag = 'scoped memory for tpu_custom_call.1']
    #allocation5 [shape = 's32[1]{0}', space=sflag, size = 0x4, scoped, tag = 'scoped memory for tpu_custom_call.1']
    #allocation6 [shape = 'u8[65536]{0}', space=vmem, size = 0x10000, scoped, tag = 'input window, operand 1, single buffered']
    #allocation7 [shape = 's32[1]{0}', space=sflag, size = 0x4, scoped, tag = 'scoped memory for tpu_custom_call.1']
    #allocation8 [shape = 'u8[40960]{0}', space=vmem, size = 0xa000, scoped, tag = 'input window, operand 2, single buffered']
    #allocation9 [shape = 'u8[131072]{0}', space=vmem, size = 0x20000, scoped, tag = 'input window, operand 3, single buffered']
    #allocation10 [shape = 's32[1]{0}', space=sflag, size = 0x4, scoped, tag = 'scoped memory for tpu_custom_call.1']
    #allocation11 [shape = 'u8[512]{0}', space=vmem, size = 0x400, scoped, tag = 'output window, operand 0, single buffered']
    %11 = vsyncpa [#allocation4], 0
    %12 = vsyncpa [#allocation7], 0
    %13 = vsyncpa [#allocation10], 0
    %14 = vsyncpa [#allocation5], 0
    // Predicated region
    $region2: #{tpu_custom_call.1} parent=1 // pred_check
      _
    $region3: #{tpu_custom_call.1} parent=1 // pred_check_branch
      %16 = sbr.rel (0) target = $region5
    $region4: #{tpu_custom_call.1} parent=1 // pred_region
      %s18 = ssub.s32 256, 256
      %19 = vsyncadd [#allocation4], %s18
      %s20 = sshll.u32 [#allocation3], 4
      %s21 = int_to_ptr.vmem [resolvable:$true] %s20
      %26 = dma.hbm_to_vmem [thread:$0]  %s0, 256, %s21, [#allocation4], 16, 16, 1
    $region5: #{tpu_custom_call.1} parent=1 // pred_fallthru
      _
    // Predicated region
    $region6: #{tpu_custom_call.1} parent=1 // pred_check
      _
    $region7: #{tpu_custom_call.1} parent=1 // pred_check_branch
      %28 = sbr.rel (0) target = $region9
    $region8: #{tpu_custom_call.1} parent=1 // pred_region
      %s30 = ssub.s32 2048, 2048
      %31 = vsyncadd [#allocation7], %s30
      %s32 = sshll.u32 [#allocation6], 4
      %s33 = int_to_ptr.vmem [resolvable:$true] %s32
      %38 = dma.hbm_to_vmem [thread:$0]  %s1, 2048, %s33, [#allocation7], 128, 128, 8
    $region9: #{tpu_custom_call.1} parent=1 // pred_fallthru
      _
    // Predicated region
    $region10: #{tpu_custom_call.1} parent=1 // pred_check
      _
    $region11: #{tpu_custom_call.1} parent=1 // pred_check_branch
      %40 = sbr.rel (0) target = $region13
    $region12: #{tpu_custom_call.1} parent=1 // pred_region
      %s42 = ssub.s32 1280, 1280
      %43 = vsyncadd [#allocation7], %s42
      %s44 = sshll.u32 [#allocation8], 4
      %s45 = int_to_ptr.vmem [resolvable:$true] %s44
      %50 = dma.hbm_to_vmem [thread:$0]  %s2, 1280, %s45, [#allocation7], 256, 256, 16
    $region13: #{tpu_custom_call.1} parent=1 // pred_fallthru
      _
    // Predicated region
    $region14: #{tpu_custom_call.1} parent=1 // pred_check
      _
    $region15: #{tpu_custom_call.1} parent=1 // pred_check_branch
      %52 = sbr.rel (0) target = $region17
    $region16: #{tpu_custom_call.1} parent=1 // pred_region
      %s54 = ssub.s32 4096, 4096
      %55 = vsyncadd [#allocation10], %s54
      %s56 = sshll.u32 [#allocation9], 4
      %s57 = int_to_ptr.vmem [resolvable:$true] %s56
      %62 = dma.hbm_to_vmem [thread:$0]  %s3, 4096, %s57, [#allocation10], 64, 64, 4
    $region17: #{tpu_custom_call.1} parent=1 // pred_fallthru
      _
    // Predicated region
    $region18: #{tpu_custom_call.1} parent=1 // pred_check
      _
    $region19: #{tpu_custom_call.1} parent=1 // pred_check_branch
      %64 = sbr.rel (0) target = $region21
    $region20: #{tpu_custom_call.1} parent=1 // pred_region
      _
    $region21: #{tpu_custom_call.1} parent=1 // pred_fallthru
      _
    // Predicated region
    $region22: #{tpu_custom_call.1} parent=1 // pred_check
      _
    $region23: #{tpu_custom_call.1} parent=1 // pred_check_branch
      %66 = sbr.rel (0) target = $region25
    $region24: #{tpu_custom_call.1} parent=1 // pred_region
      %67 = dma.done [#allocation4], 256
    $region25: #{tpu_custom_call.1} parent=1 // pred_fallthru
      _
    // Predicated region
    $region26: #{tpu_custom_call.1} parent=1 // pred_check
      _
    $region27: #{tpu_custom_call.1} parent=1 // pred_check_branch
      %69 = sbr.rel (0) target = $region29
    $region28: #{tpu_custom_call.1} parent=1 // pred_region
      %70 = dma.done [#allocation7], 2048
    $region29: #{tpu_custom_call.1} parent=1 // pred_fallthru
      _
    // Predicated region
    $region30: #{tpu_custom_call.1} parent=1 // pred_check
      _
    $region31: #{tpu_custom_call.1} parent=1 // pred_check_branch
      %72 = sbr.rel (0) target = $region33
    $region32: #{tpu_custom_call.1} parent=1 // pred_region
      %73 = dma.done [#allocation7], 1280
    $region33: #{tpu_custom_call.1} parent=1 // pred_fallthru
      _
    // Predicated region
    $region34: #{tpu_custom_call.1} parent=1 // pred_check
      _
    $region35: #{tpu_custom_call.1} parent=1 // pred_check_branch
      %75 = sbr.rel (0) target = $region37
    $region36: #{tpu_custom_call.1} parent=1 // pred_region
      %76 = dma.done [#allocation10], 4096
    $region37: #{tpu_custom_call.1} parent=1 // pred_fallthru
      _
    %v78 = vld [vmem:[#allocation3] sm:$0x1]
    %v79 = vld [vmem:[#allocation3 + $0x1] sm:$0x1]
    %v80 = vld [vmem:[#allocation3 + $0x2] sm:$0x1]
    %v81 = vld [vmem:[#allocation3 + $0x3] sm:$0x1]
    %v82 = vld [vmem:[#allocation3 + $0x4] sm:$0x1]
    %v83 = vld [vmem:[#allocation3 + $0x5] sm:$0x1]
    %v84 = vld [vmem:[#allocation3 + $0x6] sm:$0x1]
    %v85 = vld [vmem:[#allocation3 + $0x7] sm:$0x1]
    %v86 = vld [vmem:[#allocation3 + $0x8] sm:$0x1]
    %v87 = vld [vmem:[#allocation3 + $0x9] sm:$0x1]
    %v88 = vld [vmem:[#allocation3 + $0xa] sm:$0x1]
    %v89 = vld [vmem:[#allocation3 + $0xb] sm:$0x1]
    %v90 = vld [vmem:[#allocation3 + $0xc] sm:$0x1]
    %v91 = vld [vmem:[#allocation3 + $0xd] sm:$0x1]
    %v92 = vld [vmem:[#allocation3 + $0xe] sm:$0x1]
    %v93 = vld [vmem:[#allocation3 + $0xf] sm:$0x1]
    %v94 = vld [vmem:[#allocation6] sm:$0xff]
    %v95 = vld [vmem:[#allocation6 + $0x8] sm:$0xff]
    %v96 = vld [vmem:[#allocation6 + $0x10] sm:$0xff]
    %v97 = vld [vmem:[#allocation6 + $0x18] sm:$0xff]
    %v98 = vld [vmem:[#allocation6 + $0x20] sm:$0xff]
    %v99 = vld [vmem:[#allocation6 + $0x28] sm:$0xff]
    %v100 = vld [vmem:[#allocation6 + $0x30] sm:$0xff]
    %v101 = vld [vmem:[#allocation6 + $0x38] sm:$0xff]
    %v102 = vld [vmem:[#allocation6 + $0x40] sm:$0xff]
    %v103 = vld [vmem:[#allocation6 + $0x48] sm:$0xff]
    %v104 = vld [vmem:[#allocation6 + $0x50] sm:$0xff]
    %v105 = vld [vmem:[#allocation6 + $0x58] sm:$0xff]
    %v106 = vld [vmem:[#allocation6 + $0x60] sm:$0xff]
    %v107 = vld [vmem:[#allocation6 + $0x68] sm:$0xff]
    %v108 = vld [vmem:[#allocation6 + $0x70] sm:$0xff]
    %v109 = vld [vmem:[#allocation6 + $0x78] sm:$0xff]
    %v126 = vlaneseq
    %v127 = vshrl.u32 %v126, 7
    %v128 = vsub.s32 0, %v127
    %v129 = vrot.slane %v78, %v128
    %v130 = vlaneseq
    %v131 = vshrl.u32 %v130, 7
    %v132 = vsub.s32 0, %v131
    %v133 = vrot.slane %v79, %v132
    %v134 = vlaneseq
    %v135 = vshrl.u32 %v134, 7
    %v136 = vsub.s32 0, %v135
    %v137 = vrot.slane %v80, %v136
    %v138 = vlaneseq
    %v139 = vshrl.u32 %v138, 7
    %v140 = vsub.s32 0, %v139
    %v141 = vrot.slane %v81, %v140
    %v142 = vlaneseq
    %v143 = vshrl.u32 %v142, 7
    %v144 = vsub.s32 0, %v143
    %v145 = vrot.slane %v82, %v144
    %v146 = vlaneseq
    %v147 = vshrl.u32 %v146, 7
    %v148 = vsub.s32 0, %v147
    %v149 = vrot.slane %v83, %v148
    %v150 = vlaneseq
    %v151 = vshrl.u32 %v150, 7
    %v152 = vsub.s32 0, %v151
    %v153 = vrot.slane %v84, %v152
    %v154 = vlaneseq
    %v155 = vshrl.u32 %v154, 7
    %v156 = vsub.s32 0, %v155
    %v157 = vrot.slane %v85, %v156
    %v158 = vlaneseq
    %v159 = vshrl.u32 %v158, 7
    %v160 = vsub.s32 0, %v159
    %v161 = vrot.slane %v86, %v160
    %v162 = vlaneseq
    %v163 = vshrl.u32 %v162, 7
    %v164 = vsub.s32 0, %v163
    %v165 = vrot.slane %v87, %v164
    %v166 = vlaneseq
    %v167 = vshrl.u32 %v166, 7
    %v168 = vsub.s32 0, %v167
    %v169 = vrot.slane %v88, %v168
    %v170 = vlaneseq
    %v171 = vshrl.u32 %v170, 7
    %v172 = vsub.s32 0, %v171
    %v173 = vrot.slane %v89, %v172
    %v174 = vlaneseq
    %v175 = vshrl.u32 %v174, 7
    %v176 = vsub.s32 0, %v175
    %v177 = vrot.slane %v90, %v176
    %v178 = vlaneseq
    %v179 = vshrl.u32 %v178, 7
    %v180 = vsub.s32 0, %v179
    %v181 = vrot.slane %v91, %v180
    %v182 = vlaneseq
    %v183 = vshrl.u32 %v182, 7
    %v184 = vsub.s32 0, %v183
    %v185 = vrot.slane %v92, %v184
    %v186 = vlaneseq
    %v187 = vshrl.u32 %v186, 7
    %v188 = vsub.s32 0, %v187
    %v189 = vrot.slane %v93, %v188
    %v206 = vmul.f32 %v129, %v94
    %v207 = vmul.f32 %v133, %v95
    %v208 = vmul.f32 %v137, %v96
    %v209 = vmul.f32 %v141, %v97
    %v210 = vmul.f32 %v145, %v98
    %v211 = vmul.f32 %v149, %v99
    %v212 = vmul.f32 %v153, %v100
    %v213 = vmul.f32 %v157, %v101
    %v214 = vmul.f32 %v161, %v102
    %v215 = vmul.f32 %v165, %v103
    %v216 = vmul.f32 %v169, %v104
    %v217 = vmul.f32 %v173, %v105
    %v218 = vmul.f32 %v177, %v106
    %v219 = vmul.f32 %v181, %v107
    %v220 = vmul.f32 %v185, %v108
    %v221 = vmul.f32 %v189, %v109
    %v222 = vpack.c.bf16 %v207, %v206
    %v223 = vpack.c.bf16 %v209, %v208
    %v224 = vpack.c.bf16 %v211, %v210
    %v225 = vpack.c.bf16 %v213, %v212
    %v226 = vpack.c.bf16 %v215, %v214
    %v227 = vpack.c.bf16 %v217, %v216
    %v228 = vpack.c.bf16 %v219, %v218
    %v229 = vpack.c.bf16 %v221, %v220
    %v230 = vld [vmem:[#allocation8] sm:$0xff]
    %v231 = vld [vmem:[#allocation8 + $0x8] sm:$0xff]
    %v232 = vld [vmem:[#allocation8 + $0x10] sm:$0xff]
    %v233 = vld [vmem:[#allocation8 + $0x18] sm:$0xff]
    %v234 = vld [vmem:[#allocation8 + $0x20] sm:$0xff]
    %v235 = vld [vmem:[#allocation8 + $0x28] sm:$0xff]
    %v236 = vld [vmem:[#allocation8 + $0x30] sm:$0xff]
    %v237 = vld [vmem:[#allocation8 + $0x38] sm:$0xff]
    %v238 = vld [vmem:[#allocation8 + $0x40] sm:$0x11]
    %v239 = vld [vmem:[#allocation8 + $0x48] sm:$0x11]
    %v250 = vunpack.c.l.b16 %v230
    %v251 = vunpack.c.h.b16 %v230
    %v252 = vunpack.c.l.b16 %v231
    %v253 = vunpack.c.h.b16 %v231
    %v254 = vunpack.c.l.b16 %v232
    %v255 = vunpack.c.h.b16 %v232
    %v256 = vunpack.c.l.b16 %v233
    %v257 = vunpack.c.h.b16 %v233
    %v258 = vunpack.c.l.b16 %v234
    %v259 = vunpack.c.h.b16 %v234
    %v260 = vunpack.c.l.b16 %v235
    %v261 = vunpack.c.h.b16 %v235
    %v262 = vunpack.c.l.b16 %v236
    %v263 = vunpack.c.h.b16 %v236
    %v264 = vunpack.c.l.b16 %v237
    %v265 = vunpack.c.h.b16 %v237
    %v266 = vunpack.c.l.b16 %v238
    %v267 = vunpack.c.h.b16 %v238
    %v268 = vunpack.c.l.b16 %v239
    %v269 = vunpack.c.h.b16 %v239
    %v270 = vpack.c.b16 %v254, %v250
    %v271 = vpack.c.b16 %v255, %v251
    %v272 = vpack.c.b16 %v256, %v252
    %v273 = vpack.c.b16 %v257, %v253
    %v274 = vpack.c.b16 %v262, %v258
    %v275 = vpack.c.b16 %v263, %v259
    %v276 = vpack.c.b16 %v264, %v260
    %v277 = vpack.c.b16 %v265, %v261
    %v278 = vpack.c.b16 %v266, %v266
    %v279 = vpack.c.b16 %v267, %v267
    %v280 = vpack.c.b16 %v268, %v268
    %v281 = vpack.c.b16 %v269, %v269
    %vm290 = vcmask 269312
    %v292 = vsel %vm290, %v222, 0
    %v295 = vsel %vm290, %v223, 0
    %v298 = vsel %vm290, %v224, 0
    %v301 = vsel %vm290, %v225, 0
    %v304 = vsel %vm290, %v226, 0
    %v307 = vsel %vm290, %v227, 0
    %v310 = vsel %vm290, %v228, 0
    %v313 = vsel %vm290, %v229, 0
    %vm315 = vcmask 1040384
    %v316 = vsel 0, 4294967295, 65535
    %v317 = vsel %vm315, %v316, 0
    %v319 = vand.u32 %v278, %v317
    %v322 = vand.u32 %v279, %v317
    %v325 = vand.u32 %v280, %v317
    %v328 = vand.u32 %v281, %v317
    %330 = vmatprep.subr.bf16.mxu0 0
    %331 = vmatpush1.bf16.msra.mxu0 0
    %332 = vmatprep.subr.bf16.mxu0 0
    %333 = vmatpush1.bf16.msra.mxu0 0
    %334 = vmatprep.subr.bf16.mxu0 0
    %335 = vmatpush1.bf16.msra.mxu0 0
    %336 = vmatprep.subr.bf16.mxu0 0
    %337 = vmatpush1.bf16.msra.mxu0 0
    %338 = vmatprep.subr.bf16.mxu0 0
    %339 = vmatpush1.bf16.msra.mxu0 0
    %340 = vmatprep.subr.bf16.mxu0 %v322
    %341 = vmatpush1.bf16.msra.mxu0 %v319
    %342 = vmatprep.subr.bf16.mxu0 %v275
    %343 = vmatpush1.bf16.msra.mxu0 %v274
    %344 = vmatprep.subr.bf16.mxu0 %v271
    %345 = vmatpush1.bf16.msra.mxu0 %v270
    %346 = vmatprep.subr.bf16.mxu0 0
    %347 = vmatpush2.bf16.msra.mxu0 0
    %348 = vmatprep.subr.bf16.mxu0 0
    %349 = vmatpush2.bf16.msra.mxu0 0
    %350 = vmatprep.subr.bf16.mxu0 0
    %351 = vmatpush2.bf16.msra.mxu0 0
    %352 = vmatprep.subr.bf16.mxu0 0
    %353 = vmatpush2.bf16.msra.mxu0 0
    %354 = vmatprep.subr.bf16.mxu0 0
    %355 = vmatpush2.bf16.msra.mxu0 0
    %356 = vmatprep.subr.bf16.mxu0 0
    %357 = vmatpush2.bf16.msra.mxu0 0
    %358 = vmatprep.subr.bf16.mxu0 0
    %359 = vmatpush2.bf16.msra.mxu0 0
    %360 = vmatprep.subr.bf16.mxu0 0
    %361 = vmatpush2.bf16.msra.mxu0 0
    %362 = vmatprep.mubr.bf16.mxu0 0
    %363 = vmatmul.mubr.bf16.gmra.mxu0 %v292
    %v364 = vpop.f32.mrf.mxu0
    %v365 = vadd.f32 0.0, %v364
    %v366 = vpop.f32.mrf.mxu0
    %v367 = vadd.f32 0.0, %v366
    %v368 = vpop.f32.mrf.mxu0
    %v369 = vadd.f32 0.0, %v368
    %v370 = vpop.f32.mrf.mxu0
    %v371 = vadd.f32 0.0, %v370
    %372 = vmatprep.mubr.bf16.mxu0 0
    %373 = vmatmul.mubr.bf16.gmra.mxu0 %v295
    %v374 = vpop.f32.mrf.mxu0
    %v375 = vadd.f32 0.0, %v374
    %v376 = vpop.f32.mrf.mxu0
    %v377 = vadd.f32 0.0, %v376
    %v378 = vpop.f32.mrf.mxu0
    %v379 = vadd.f32 0.0, %v378
    %v380 = vpop.f32.mrf.mxu0
    %v381 = vadd.f32 0.0, %v380
    %382 = vmatprep.mubr.bf16.mxu0 0
    %383 = vmatmul.mubr.bf16.gmra.mxu0 %v298
    %v384 = vpop.f32.mrf.mxu0
    %v385 = vadd.f32 0.0, %v384
    %v386 = vpop.f32.mrf.mxu0
    %v387 = vadd.f32 0.0, %v386
    %v388 = vpop.f32.mrf.mxu0
    %v389 = vadd.f32 0.0, %v388
    %v390 = vpop.f32.mrf.mxu0
    %v391 = vadd.f32 0.0, %v390
    %392 = vmatprep.mubr.bf16.mxu0 0
    %393 = vmatmul.mubr.bf16.gmra.mxu0 %v301
    %v394 = vpop.f32.mrf.mxu0
    %v395 = vadd.f32 0.0, %v394
    %v396 = vpop.f32.mrf.mxu0
    %v397 = vadd.f32 0.0, %v396
    %v398 = vpop.f32.mrf.mxu0
    %v399 = vadd.f32 0.0, %v398
    %v400 = vpop.f32.mrf.mxu0
    %v401 = vadd.f32 0.0, %v400
    %402 = vmatprep.mubr.bf16.mxu0 0
    %403 = vmatmul.mubr.bf16.gmra.mxu0 %v304
    %v404 = vpop.f32.mrf.mxu0
    %v405 = vadd.f32 0.0, %v404
    %v406 = vpop.f32.mrf.mxu0
    %v407 = vadd.f32 0.0, %v406
    %v408 = vpop.f32.mrf.mxu0
    %v409 = vadd.f32 0.0, %v408
    %v410 = vpop.f32.mrf.mxu0
    %v411 = vadd.f32 0.0, %v410
    %412 = vmatprep.mubr.bf16.mxu0 0
    %413 = vmatmul.mubr.bf16.gmra.mxu0 %v307
    %v414 = vpop.f32.mrf.mxu0
    %v415 = vadd.f32 0.0, %v414
    %v416 = vpop.f32.mrf.mxu0
    %v417 = vadd.f32 0.0, %v416
    %v418 = vpop.f32.mrf.mxu0
    %v419 = vadd.f32 0.0, %v418
    %v420 = vpop.f32.mrf.mxu0
    %v421 = vadd.f32 0.0, %v420
    %422 = vmatprep.mubr.bf16.mxu0 0
    %423 = vmatmul.mubr.bf16.gmra.mxu0 %v310
    %v424 = vpop.f32.mrf.mxu0
    %v425 = vadd.f32 0.0, %v424
    %v426 = vpop.f32.mrf.mxu0
    %v427 = vadd.f32 0.0, %v426
    %v428 = vpop.f32.mrf.mxu0
    %v429 = vadd.f32 0.0, %v428
    %v430 = vpop.f32.mrf.mxu0
    %v431 = vadd.f32 0.0, %v430
    %432 = vmatprep.mubr.bf16.mxu0 0
    %433 = vmatmul.mubr.bf16.gmra.mxu0 %v313
    %v434 = vpop.f32.mrf.mxu0
    %v435 = vadd.f32 0.0, %v434
    %v436 = vpop.f32.mrf.mxu0
    %v437 = vadd.f32 0.0, %v436
    %v438 = vpop.f32.mrf.mxu0
    %v439 = vadd.f32 0.0, %v438
    %v440 = vpop.f32.mrf.mxu0
    %v441 = vadd.f32 0.0, %v440
    %442 = vdwg.mxu0
    %443 = vmatprep.subr.bf16.mxu0 0
    %444 = vmatpush1.bf16.msra.mxu0 0
    %445 = vmatprep.subr.bf16.mxu0 0
    %446 = vmatpush1.bf16.msra.mxu0 0
    %447 = vmatprep.subr.bf16.mxu0 0
    %448 = vmatpush1.bf16.msra.mxu0 0
    %449 = vmatprep.subr.bf16.mxu0 0
    %450 = vmatpush1.bf16.msra.mxu0 0
    %451 = vmatprep.subr.bf16.mxu0 0
    %452 = vmatpush1.bf16.msra.mxu0 0
    %453 = vmatprep.subr.bf16.mxu0 %v328
    %454 = vmatpush1.bf16.msra.mxu0 %v325
    %455 = vmatprep.subr.bf16.mxu0 %v277
    %456 = vmatpush1.bf16.msra.mxu0 %v276
    %457 = vmatprep.subr.bf16.mxu0 %v273
    %458 = vmatpush1.bf16.msra.mxu0 %v272
    %459 = vmatprep.subr.bf16.mxu0 0
    %460 = vmatpush2.bf16.msra.mxu0 0
    %461 = vmatprep.subr.bf16.mxu0 0
    %462 = vmatpush2.bf16.msra.mxu0 0
    %463 = vmatprep.subr.bf16.mxu0 0
    %464 = vmatpush2.bf16.msra.mxu0 0
    %465 = vmatprep.subr.bf16.mxu0 0
    %466 = vmatpush2.bf16.msra.mxu0 0
    %467 = vmatprep.subr.bf16.mxu0 0
    %468 = vmatpush2.bf16.msra.mxu0 0
    %469 = vmatprep.subr.bf16.mxu0 0
    %470 = vmatpush2.bf16.msra.mxu0 0
    %471 = vmatprep.subr.bf16.mxu0 0
    %472 = vmatpush2.bf16.msra.mxu0 0
    %473 = vmatprep.subr.bf16.mxu0 0
    %474 = vmatpush2.bf16.msra.mxu0 0
    %475 = vmatprep.mubr.bf16.mxu0 0
    %476 = vmatmul.mubr.bf16.gmra.mxu0 %v292
    %v477 = vpop.f32.mrf.mxu0
    %v478 = vadd.f32 0.0, %v477
    %v479 = vpop.f32.mrf.mxu0
    %v480 = vadd.f32 0.0, %v479
    %v481 = vpop.f32.mrf.mxu0
    %v482 = vadd.f32 0.0, %v481
    %v483 = vpop.f32.mrf.mxu0
    %v484 = vadd.f32 0.0, %v483
    %485 = vmatprep.mubr.bf16.mxu0 0
    %486 = vmatmul.mubr.bf16.gmra.mxu0 %v295
    %v487 = vpop.f32.mrf.mxu0
    %v488 = vadd.f32 0.0, %v487
    %v489 = vpop.f32.mrf.mxu0
    %v490 = vadd.f32 0.0, %v489
    %v491 = vpop.f32.mrf.mxu0
    %v492 = vadd.f32 0.0, %v491
    %v493 = vpop.f32.mrf.mxu0
    %v494 = vadd.f32 0.0, %v493
    %495 = vmatprep.mubr.bf16.mxu0 0
    %496 = vmatmul.mubr.bf16.gmra.mxu0 %v298
    %v497 = vpop.f32.mrf.mxu0
    %v498 = vadd.f32 0.0, %v497
    %v499 = vpop.f32.mrf.mxu0
    %v500 = vadd.f32 0.0, %v499
    %v501 = vpop.f32.mrf.mxu0
    %v502 = vadd.f32 0.0, %v501
    %v503 = vpop.f32.mrf.mxu0
    %v504 = vadd.f32 0.0, %v503
    %505 = vmatprep.mubr.bf16.mxu0 0
    %506 = vmatmul.mubr.bf16.gmra.mxu0 %v301
    %v507 = vpop.f32.mrf.mxu0
    %v508 = vadd.f32 0.0, %v507
    %v509 = vpop.f32.mrf.mxu0
    %v510 = vadd.f32 0.0, %v509
    %v511 = vpop.f32.mrf.mxu0
    %v512 = vadd.f32 0.0, %v511
    %v513 = vpop.f32.mrf.mxu0
    %v514 = vadd.f32 0.0, %v513
    %515 = vmatprep.mubr.bf16.mxu0 0
    %516 = vmatmul.mubr.bf16.gmra.mxu0 %v304
    %v517 = vpop.f32.mrf.mxu0
    %v518 = vadd.f32 0.0, %v517
    %v519 = vpop.f32.mrf.mxu0
    %v520 = vadd.f32 0.0, %v519
    %v521 = vpop.f32.mrf.mxu0
    %v522 = vadd.f32 0.0, %v521
    %v523 = vpop.f32.mrf.mxu0
    %v524 = vadd.f32 0.0, %v523
    %525 = vmatprep.mubr.bf16.mxu0 0
    %526 = vmatmul.mubr.bf16.gmra.mxu0 %v307
    %v527 = vpop.f32.mrf.mxu0
    %v528 = vadd.f32 0.0, %v527
    %v529 = vpop.f32.mrf.mxu0
    %v530 = vadd.f32 0.0, %v529
    %v531 = vpop.f32.mrf.mxu0
    %v532 = vadd.f32 0.0, %v531
    %v533 = vpop.f32.mrf.mxu0
    %v534 = vadd.f32 0.0, %v533
    %535 = vmatprep.mubr.bf16.mxu0 0
    %536 = vmatmul.mubr.bf16.gmra.mxu0 %v310
    %v537 = vpop.f32.mrf.mxu0
    %v538 = vadd.f32 0.0, %v537
    %v539 = vpop.f32.mrf.mxu0
    %v540 = vadd.f32 0.0, %v539
    %v541 = vpop.f32.mrf.mxu0
    %v542 = vadd.f32 0.0, %v541
    %v543 = vpop.f32.mrf.mxu0
    %v544 = vadd.f32 0.0, %v543
    %545 = vmatprep.mubr.bf16.mxu0 0
    %546 = vmatmul.mubr.bf16.gmra.mxu0 %v313
    %v547 = vpop.f32.mrf.mxu0
    %v548 = vadd.f32 0.0, %v547
    %v549 = vpop.f32.mrf.mxu0
    %v550 = vadd.f32 0.0, %v549
    %v551 = vpop.f32.mrf.mxu0
    %v552 = vadd.f32 0.0, %v551
    %v553 = vpop.f32.mrf.mxu0
    %v554 = vadd.f32 0.0, %v553
    %555 = vdwg.mxu0
    %v556 = vmax.f32 %v365, 0.0
    %v557 = vmax.f32 %v367, 0.0
    %v558 = vmax.f32 %v478, 0.0
    %v559 = vmax.f32 %v480, 0.0
    %v560 = vmax.f32 %v369, 0.0
    %v561 = vmax.f32 %v371, 0.0
    %v562 = vmax.f32 %v482, 0.0
    %v563 = vmax.f32 %v484, 0.0
    %v564 = vmax.f32 %v375, 0.0
    %v565 = vmax.f32 %v377, 0.0
    %v566 = vmax.f32 %v488, 0.0
    %v567 = vmax.f32 %v490, 0.0
    %v568 = vmax.f32 %v379, 0.0
    %v569 = vmax.f32 %v381, 0.0
    %v570 = vmax.f32 %v492, 0.0
    %v571 = vmax.f32 %v494, 0.0
    %v572 = vmax.f32 %v385, 0.0
    %v573 = vmax.f32 %v387, 0.0
    %v574 = vmax.f32 %v498, 0.0
    %v575 = vmax.f32 %v500, 0.0
    %v576 = vmax.f32 %v389, 0.0
    %v577 = vmax.f32 %v391, 0.0
    %v578 = vmax.f32 %v502, 0.0
    %v579 = vmax.f32 %v504, 0.0
    %v580 = vmax.f32 %v395, 0.0
    %v581 = vmax.f32 %v397, 0.0
    %v582 = vmax.f32 %v508, 0.0
    %v583 = vmax.f32 %v510, 0.0
    %v584 = vmax.f32 %v399, 0.0
    %v585 = vmax.f32 %v401, 0.0
    %v586 = vmax.f32 %v512, 0.0
    %v587 = vmax.f32 %v514, 0.0
    %v588 = vmax.f32 %v405, 0.0
    %v589 = vmax.f32 %v407, 0.0
    %v590 = vmax.f32 %v518, 0.0
    %v591 = vmax.f32 %v520, 0.0
    %v592 = vmax.f32 %v409, 0.0
    %v593 = vmax.f32 %v411, 0.0
    %v594 = vmax.f32 %v522, 0.0
    %v595 = vmax.f32 %v524, 0.0
    %v596 = vmax.f32 %v415, 0.0
    %v597 = vmax.f32 %v417, 0.0
    %v598 = vmax.f32 %v528, 0.0
    %v599 = vmax.f32 %v530, 0.0
    %v600 = vmax.f32 %v419, 0.0
    %v601 = vmax.f32 %v421, 0.0
    %v602 = vmax.f32 %v532, 0.0
    %v603 = vmax.f32 %v534, 0.0
    %v604 = vmax.f32 %v425, 0.0
    %v605 = vmax.f32 %v427, 0.0
    %v606 = vmax.f32 %v538, 0.0
    %v607 = vmax.f32 %v540, 0.0
    %v608 = vmax.f32 %v429, 0.0
    %v609 = vmax.f32 %v431, 0.0
    %v610 = vmax.f32 %v542, 0.0
    %v611 = vmax.f32 %v544, 0.0
    %v612 = vmax.f32 %v435, 0.0
    %v613 = vmax.f32 %v437, 0.0
    %v614 = vmax.f32 %v548, 0.0
    %v615 = vmax.f32 %v550, 0.0
    %v616 = vmax.f32 %v439, 0.0
    %v617 = vmax.f32 %v441, 0.0
    %v618 = vmax.f32 %v552, 0.0
    %v619 = vmax.f32 %v554, 0.0
    %v620 = vpack.c.bf16 %v560, %v556
    %v621 = vpack.c.bf16 %v561, %v557
    %v622 = vpack.c.bf16 %v562, %v558
    %v623 = vpack.c.bf16 %v563, %v559
    %v624 = vpack.c.bf16 %v568, %v564
    %v625 = vpack.c.bf16 %v569, %v565
    %v626 = vpack.c.bf16 %v570, %v566
    %v627 = vpack.c.bf16 %v571, %v567
    %v628 = vpack.c.bf16 %v576, %v572
    %v629 = vpack.c.bf16 %v577, %v573
    %v630 = vpack.c.bf16 %v578, %v574
    %v631 = vpack.c.bf16 %v579, %v575
    %v632 = vpack.c.bf16 %v584, %v580
    %v633 = vpack.c.bf16 %v585, %v581
    %v634 = vpack.c.bf16 %v586, %v582
    %v635 = vpack.c.bf16 %v587, %v583
    %v636 = vpack.c.bf16 %v592, %v588
    %v637 = vpack.c.bf16 %v593, %v589
    %v638 = vpack.c.bf16 %v594, %v590
    %v639 = vpack.c.bf16 %v595, %v591
    %v640 = vpack.c.bf16 %v600, %v596
    %v641 = vpack.c.bf16 %v601, %v597
    %v642 = vpack.c.bf16 %v602, %v598
    %v643 = vpack.c.bf16 %v603, %v599
    %v644 = vpack.c.bf16 %v608, %v604
    %v645 = vpack.c.bf16 %v609, %v605
    %v646 = vpack.c.bf16 %v610, %v606
    %v647 = vpack.c.bf16 %v611, %v607
    %v648 = vpack.c.bf16 %v616, %v612
    %v649 = vpack.c.bf16 %v617, %v613
    %v650 = vpack.c.bf16 %v618, %v614
    %v651 = vpack.c.bf16 %v619, %v615
    %v652 = vld [vmem:[#allocation9] sm:$0xf]
    %v653 = vld [vmem:[#allocation9 + $0x4] sm:$0xf]
    %v654 = vld [vmem:[#allocation9 + $0x8] sm:$0xf]
    %v655 = vld [vmem:[#allocation9 + $0xc] sm:$0xf]
    %v656 = vld [vmem:[#allocation9 + $0x10] sm:$0xf]
    %v657 = vld [vmem:[#allocation9 + $0x14] sm:$0xf]
    %v658 = vld [vmem:[#allocation9 + $0x18] sm:$0xf]
    %v659 = vld [vmem:[#allocation9 + $0x1c] sm:$0xf]
    %v660 = vld [vmem:[#allocation9 + $0x20] sm:$0xf]
    %v661 = vld [vmem:[#allocation9 + $0x24] sm:$0xf]
    %v662 = vld [vmem:[#allocation9 + $0x28] sm:$0xf]
    %v663 = vld [vmem:[#allocation9 + $0x2c] sm:$0xf]
    %v664 = vld [vmem:[#allocation9 + $0x30] sm:$0xf]
    %v665 = vld [vmem:[#allocation9 + $0x34] sm:$0xf]
    %v666 = vld [vmem:[#allocation9 + $0x38] sm:$0xf]
    %v667 = vld [vmem:[#allocation9 + $0x3c] sm:$0xf]
    %v668 = vld [vmem:[#allocation9 + $0x40] sm:$0xf]
    %v669 = vld [vmem:[#allocation9 + $0x44] sm:$0xf]
    %v670 = vld [vmem:[#allocation9 + $0x48] sm:$0xf]
    %v671 = vld [vmem:[#allocation9 + $0x4c] sm:$0xf]
    %v672 = vld [vmem:[#allocation9 + $0x50] sm:$0xf]
    %v673 = vld [vmem:[#allocation9 + $0x54] sm:$0xf]
    %v674 = vld [vmem:[#allocation9 + $0x58] sm:$0xf]
    %v675 = vld [vmem:[#allocation9 + $0x5c] sm:$0xf]
    %v676 = vld [vmem:[#allocation9 + $0x60] sm:$0xf]
    %v677 = vld [vmem:[#allocation9 + $0x64] sm:$0xf]
    %v678 = vld [vmem:[#allocation9 + $0x68] sm:$0xf]
    %v679 = vld [vmem:[#allocation9 + $0x6c] sm:$0xf]
    %v680 = vld [vmem:[#allocation9 + $0x70] sm:$0xf]
    %v681 = vld [vmem:[#allocation9 + $0x74] sm:$0xf]
    %v682 = vld [vmem:[#allocation9 + $0x78] sm:$0xf]
    %v683 = vld [vmem:[#allocation9 + $0x7c] sm:$0xf]
    %v684 = vld [vmem:[#allocation9 + $0x80] sm:$0xf]
    %v685 = vld [vmem:[#allocation9 + $0x84] sm:$0xf]
    %v686 = vld [vmem:[#allocation9 + $0x88] sm:$0xf]
    %v687 = vld [vmem:[#allocation9 + $0x8c] sm:$0xf]
    %v688 = vld [vmem:[#allocation9 + $0x90] sm:$0xf]
    %v689 = vld [vmem:[#allocation9 + $0x94] sm:$0xf]
    %v690 = vld [vmem:[#allocation9 + $0x98] sm:$0xf]
    %v691 = vld [vmem:[#allocation9 + $0x9c] sm:$0xf]
    %v692 = vld [vmem:[#allocation9 + $0xa0] sm:$0xf]
    %v693 = vld [vmem:[#allocation9 + $0xa4] sm:$0xf]
    %v694 = vld [vmem:[#allocation9 + $0xa8] sm:$0xf]
    %v695 = vld [vmem:[#allocation9 + $0xac] sm:$0xf]
    %v696 = vld [vmem:[#allocation9 + $0xb0] sm:$0xf]
    %v697 = vld [vmem:[#allocation9 + $0xb4] sm:$0xf]
    %v698 = vld [vmem:[#allocation9 + $0xb8] sm:$0xf]
    %v699 = vld [vmem:[#allocation9 + $0xbc] sm:$0xf]
    %v700 = vld [vmem:[#allocation9 + $0xc0] sm:$0xf]
    %v701 = vld [vmem:[#allocation9 + $0xc4] sm:$0xf]
    %v702 = vld [vmem:[#allocation9 + $0xc8] sm:$0xf]
    %v703 = vld [vmem:[#allocation9 + $0xcc] sm:$0xf]
    %v704 = vld [vmem:[#allocation9 + $0xd0] sm:$0xf]
    %v705 = vld [vmem:[#allocation9 + $0xd4] sm:$0xf]
    %v706 = vld [vmem:[#allocation9 + $0xd8] sm:$0xf]
    %v707 = vld [vmem:[#allocation9 + $0xdc] sm:$0xf]
    %v708 = vld [vmem:[#allocation9 + $0xe0] sm:$0xf]
    %v709 = vld [vmem:[#allocation9 + $0xe4] sm:$0xf]
    %v710 = vld [vmem:[#allocation9 + $0xe8] sm:$0xf]
    %v711 = vld [vmem:[#allocation9 + $0xec] sm:$0xf]
    %v712 = vld [vmem:[#allocation9 + $0xf0] sm:$0xf]
    %v713 = vld [vmem:[#allocation9 + $0xf4] sm:$0xf]
    %v714 = vld [vmem:[#allocation9 + $0xf8] sm:$0xf]
    %v715 = vld [vmem:[#allocation9 + $0xfc] sm:$0xf]
    %v780 = vunpack.c.l.b16 %v652
    %v781 = vunpack.c.l.b16 %v653
    %v782 = vunpack.c.l.b16 %v654
    %v783 = vunpack.c.l.b16 %v655
    %v784 = vunpack.c.l.b16 %v656
    %v785 = vunpack.c.l.b16 %v657
    %v786 = vunpack.c.l.b16 %v658
    %v787 = vunpack.c.l.b16 %v659
    %v788 = vunpack.c.l.b16 %v660
    %v789 = vunpack.c.l.b16 %v661
    %v790 = vunpack.c.l.b16 %v662
    %v791 = vunpack.c.l.b16 %v663
    %v792 = vunpack.c.l.b16 %v664
    %v793 = vunpack.c.l.b16 %v665
    %v794 = vunpack.c.l.b16 %v666
    %v795 = vunpack.c.l.b16 %v667
    %v796 = vunpack.c.l.b16 %v668
    %v797 = vunpack.c.l.b16 %v669
    %v798 = vunpack.c.l.b16 %v670
    %v799 = vunpack.c.l.b16 %v671
    %v800 = vunpack.c.l.b16 %v672
    %v801 = vunpack.c.l.b16 %v673
    %v802 = vunpack.c.l.b16 %v674
    %v803 = vunpack.c.l.b16 %v675
    %v804 = vunpack.c.l.b16 %v676
    %v805 = vunpack.c.l.b16 %v677
    %v806 = vunpack.c.l.b16 %v678
    %v807 = vunpack.c.l.b16 %v679
    %v808 = vunpack.c.l.b16 %v680
    %v809 = vunpack.c.l.b16 %v681
    %v810 = vunpack.c.l.b16 %v682
    %v811 = vunpack.c.l.b16 %v683
    %v812 = vunpack.c.l.b16 %v684
    %v813 = vunpack.c.l.b16 %v685
    %v814 = vunpack.c.l.b16 %v686
    %v815 = vunpack.c.l.b16 %v687
    %v816 = vunpack.c.l.b16 %v688
    %v817 = vunpack.c.l.b16 %v689
    %v818 = vunpack.c.l.b16 %v690
    %v819 = vunpack.c.l.b16 %v691
    %v820 = vunpack.c.l.b16 %v692
    %v821 = vunpack.c.l.b16 %v693
    %v822 = vunpack.c.l.b16 %v694
    %v823 = vunpack.c.l.b16 %v695
    %v824 = vunpack.c.l.b16 %v696
    %v825 = vunpack.c.l.b16 %v697
    %v826 = vunpack.c.l.b16 %v698
    %v827 = vunpack.c.l.b16 %v699
    %v828 = vunpack.c.l.b16 %v700
    %v829 = vunpack.c.l.b16 %v701
    %v830 = vunpack.c.l.b16 %v702
    %v831 = vunpack.c.l.b16 %v703
    %v832 = vunpack.c.l.b16 %v704
    %v833 = vunpack.c.l.b16 %v705
    %v834 = vunpack.c.l.b16 %v706
    %v835 = vunpack.c.l.b16 %v707
    %v836 = vunpack.c.l.b16 %v708
    %v837 = vunpack.c.l.b16 %v709
    %v838 = vunpack.c.l.b16 %v710
    %v839 = vunpack.c.l.b16 %v711
    %v840 = vunpack.c.l.b16 %v712
    %v841 = vunpack.c.l.b16 %v713
    %v842 = vunpack.c.l.b16 %v714
    %v843 = vunpack.c.l.b16 %v715
    %v844 = vpack.c.b16 %v781, %v780
    %v845 = vpack.c.b16 %v783, %v782
    %v846 = vpack.c.b16 %v785, %v784
    %v847 = vpack.c.b16 %v787, %v786
    %v848 = vpack.c.b16 %v789, %v788
    %v849 = vpack.c.b16 %v791, %v790
    %v850 = vpack.c.b16 %v793, %v792
    %v851 = vpack.c.b16 %v795, %v794
    %v852 = vpack.c.b16 %v797, %v796
    %v853 = vpack.c.b16 %v799, %v798
    %v854 = vpack.c.b16 %v801, %v800
    %v855 = vpack.c.b16 %v803, %v802
    %v856 = vpack.c.b16 %v805, %v804
    %v857 = vpack.c.b16 %v807, %v806
    %v858 = vpack.c.b16 %v809, %v808
    %v859 = vpack.c.b16 %v811, %v810
    %v860 = vpack.c.b16 %v813, %v812
    %v861 = vpack.c.b16 %v815, %v814
    %v862 = vpack.c.b16 %v817, %v816
    %v863 = vpack.c.b16 %v819, %v818
    %v864 = vpack.c.b16 %v821, %v820
    %v865 = vpack.c.b16 %v823, %v822
    %v866 = vpack.c.b16 %v825, %v824
    %v867 = vpack.c.b16 %v827, %v826
    %v868 = vpack.c.b16 %v829, %v828
    %v869 = vpack.c.b16 %v831, %v830
    %v870 = vpack.c.b16 %v833, %v832
    %v871 = vpack.c.b16 %v835, %v834
    %v872 = vpack.c.b16 %v837, %v836
    %v873 = vpack.c.b16 %v839, %v838
    %v874 = vpack.c.b16 %v841, %v840
    %v875 = vpack.c.b16 %v843, %v842
    %908 = vmatprep.subr.bf16.mxu0 0
    %909 = vmatpush1.bf16.msra.mxu0 %v851
    %910 = vmatprep.subr.bf16.mxu0 0
    %911 = vmatpush1.bf16.msra.mxu0 %v850
    %912 = vmatprep.subr.bf16.mxu0 0
    %913 = vmatpush1.bf16.msra.mxu0 %v849
    %914 = vmatprep.subr.bf16.mxu0 0
    %915 = vmatpush1.bf16.msra.mxu0 %v848
    %916 = vmatprep.subr.bf16.mxu0 0
    %917 = vmatpush1.bf16.msra.mxu0 %v847
    %918 = vmatprep.subr.bf16.mxu0 0
    %919 = vmatpush1.bf16.msra.mxu0 %v846
    %920 = vmatprep.subr.bf16.mxu0 0
    %921 = vmatpush1.bf16.msra.mxu0 %v845
    %922 = vmatprep.subr.bf16.mxu0 0
    %923 = vmatpush1.bf16.msra.mxu0 %v844
    %924 = vmatprep.subr.bf16.mxu0 0
    %925 = vmatpush2.bf16.msra.mxu0 %v859
    %926 = vmatprep.subr.bf16.mxu0 0
    %927 = vmatpush2.bf16.msra.mxu0 %v858
    %928 = vmatprep.subr.bf16.mxu0 0
    %929 = vmatpush2.bf16.msra.mxu0 %v857
    %930 = vmatprep.subr.bf16.mxu0 0
    %931 = vmatpush2.bf16.msra.mxu0 %v856
    %932 = vmatprep.subr.bf16.mxu0 0
    %933 = vmatpush2.bf16.msra.mxu0 %v855
    %934 = vmatprep.subr.bf16.mxu0 0
    %935 = vmatpush2.bf16.msra.mxu0 %v854
    %936 = vmatprep.subr.bf16.mxu0 0
    %937 = vmatpush2.bf16.msra.mxu0 %v853
    %938 = vmatprep.subr.bf16.mxu0 0
    %939 = vmatpush2.bf16.msra.mxu0 %v852
    %940 = vmatprep.mubr.bf16.mxu0 %v621
    %941 = vmatmul.mubr.bf16.gmra.mxu0 %v620
    %v942 = vpop.f32.mrf.mxu0
    %v943 = vadd.f32 0.0, %v942
    %v944 = vpop.f32.mrf.mxu0
    %v945 = vpop.f32.mrf.mxu0
    %v946 = vadd.f32 0.0, %v945
    %v947 = vpop.f32.mrf.mxu0
    %948 = vmatprep.mubr.bf16.mxu0 %v625
    %949 = vmatmul.mubr.bf16.gmra.mxu0 %v624
    %v950 = vpop.f32.mrf.mxu0
    %v951 = vadd.f32 0.0, %v950
    %v952 = vpop.f32.mrf.mxu0
    %v953 = vpop.f32.mrf.mxu0
    %v954 = vadd.f32 0.0, %v953
    %v955 = vpop.f32.mrf.mxu0
    %956 = vmatprep.mubr.bf16.mxu0 %v629
    %957 = vmatmul.mubr.bf16.gmra.mxu0 %v628
    %v958 = vpop.f32.mrf.mxu0
    %v959 = vadd.f32 0.0, %v958
    %v960 = vpop.f32.mrf.mxu0
    %v961 = vpop.f32.mrf.mxu0
    %v962 = vadd.f32 0.0, %v961
    %v963 = vpop.f32.mrf.mxu0
    %964 = vmatprep.mubr.bf16.mxu0 %v633
    %965 = vmatmul.mubr.bf16.gmra.mxu0 %v632
    %v966 = vpop.f32.mrf.mxu0
    %v967 = vadd.f32 0.0, %v966
    %v968 = vpop.f32.mrf.mxu0
    %v969 = vpop.f32.mrf.mxu0
    %v970 = vadd.f32 0.0, %v969
    %v971 = vpop.f32.mrf.mxu0
    %972 = vmatprep.mubr.bf16.mxu0 %v637
    %973 = vmatmul.mubr.bf16.gmra.mxu0 %v636
    %v974 = vpop.f32.mrf.mxu0
    %v975 = vadd.f32 0.0, %v974
    %v976 = vpop.f32.mrf.mxu0
    %v977 = vpop.f32.mrf.mxu0
    %v978 = vadd.f32 0.0, %v977
    %v979 = vpop.f32.mrf.mxu0
    %980 = vmatprep.mubr.bf16.mxu0 %v641
    %981 = vmatmul.mubr.bf16.gmra.mxu0 %v640
    %v982 = vpop.f32.mrf.mxu0
    %v983 = vadd.f32 0.0, %v982
    %v984 = vpop.f32.mrf.mxu0
    %v985 = vpop.f32.mrf.mxu0
    %v986 = vadd.f32 0.0, %v985
    %v987 = vpop.f32.mrf.mxu0
    %988 = vmatprep.mubr.bf16.mxu0 %v645
    %989 = vmatmul.mubr.bf16.gmra.mxu0 %v644
    %v990 = vpop.f32.mrf.mxu0
    %v991 = vadd.f32 0.0, %v990
    %v992 = vpop.f32.mrf.mxu0
    %v993 = vpop.f32.mrf.mxu0
    %v994 = vadd.f32 0.0, %v993
    %v995 = vpop.f32.mrf.mxu0
    %996 = vmatprep.mubr.bf16.mxu0 %v649
    %997 = vmatmul.mubr.bf16.gmra.mxu0 %v648
    %v998 = vpop.f32.mrf.mxu0
    %v999 = vadd.f32 0.0, %v998
    %v1000 = vpop.f32.mrf.mxu0
    %v1001 = vpop.f32.mrf.mxu0
    %v1002 = vadd.f32 0.0, %v1001
    %v1003 = vpop.f32.mrf.mxu0
    %1004 = vdwg.mxu0
    %1005 = vmatprep.subr.bf16.mxu0 0
    %1006 = vmatpush1.bf16.msra.mxu0 %v867
    %1007 = vmatprep.subr.bf16.mxu0 0
    %1008 = vmatpush1.bf16.msra.mxu0 %v866
    %1009 = vmatprep.subr.bf16.mxu0 0
    %1010 = vmatpush1.bf16.msra.mxu0 %v865
    %1011 = vmatprep.subr.bf16.mxu0 0
    %1012 = vmatpush1.bf16.msra.mxu0 %v864
    %1013 = vmatprep.subr.bf16.mxu0 0
    %1014 = vmatpush1.bf16.msra.mxu0 %v863
    %1015 = vmatprep.subr.bf16.mxu0 0
    %1016 = vmatpush1.bf16.msra.mxu0 %v862
    %1017 = vmatprep.subr.bf16.mxu0 0
    %1018 = vmatpush1.bf16.msra.mxu0 %v861
    %1019 = vmatprep.subr.bf16.mxu0 0
    %1020 = vmatpush1.bf16.msra.mxu0 %v860
    %1021 = vmatprep.subr.bf16.mxu0 0
    %1022 = vmatpush2.bf16.msra.mxu0 %v875
    %1023 = vmatprep.subr.bf16.mxu0 0
    %1024 = vmatpush2.bf16.msra.mxu0 %v874
    %1025 = vmatprep.subr.bf16.mxu0 0
    %1026 = vmatpush2.bf16.msra.mxu0 %v873
    %1027 = vmatprep.subr.bf16.mxu0 0
    %1028 = vmatpush2.bf16.msra.mxu0 %v872
    %1029 = vmatprep.subr.bf16.mxu0 0
    %1030 = vmatpush2.bf16.msra.mxu0 %v871
    %1031 = vmatprep.subr.bf16.mxu0 0
    %1032 = vmatpush2.bf16.msra.mxu0 %v870
    %1033 = vmatprep.subr.bf16.mxu0 0
    %1034 = vmatpush2.bf16.msra.mxu0 %v869
    %1035 = vmatprep.subr.bf16.mxu0 0
    %1036 = vmatpush2.bf16.msra.mxu0 %v868
    %1037 = vmatprep.mubr.bf16.mxu0 %v623
    %1038 = vmatmul.mubr.bf16.gmra.mxu0 %v622
    %v1039 = vpop.f32.mrf.mxu0
    %v1040 = vadd.f32 %v943, %v1039
    %v1041 = vpop.f32.mrf.mxu0
    %v1042 = vpop.f32.mrf.mxu0
    %v1043 = vadd.f32 %v946, %v1042
    %v1044 = vpop.f32.mrf.mxu0
    %1045 = vmatprep.mubr.bf16.mxu0 %v627
    %1046 = vmatmul.mubr.bf16.gmra.mxu0 %v626
    %v1047 = vpop.f32.mrf.mxu0
    %v1048 = vadd.f32 %v951, %v1047
    %v1049 = vpop.f32.mrf.mxu0
    %v1050 = vpop.f32.mrf.mxu0
    %v1051 = vadd.f32 %v954, %v1050
    %v1052 = vpop.f32.mrf.mxu0
    %1053 = vmatprep.mubr.bf16.mxu0 %v631
    %1054 = vmatmul.mubr.bf16.gmra.mxu0 %v630
    %v1055 = vpop.f32.mrf.mxu0
    %v1056 = vadd.f32 %v959, %v1055
    %v1057 = vpop.f32.mrf.mxu0
    %v1058 = vpop.f32.mrf.mxu0
    %v1059 = vadd.f32 %v962, %v1058
    %v1060 = vpop.f32.mrf.mxu0
    %1061 = vmatprep.mubr.bf16.mxu0 %v635
    %1062 = vmatmul.mubr.bf16.gmra.mxu0 %v634
    %v1063 = vpop.f32.mrf.mxu0
    %v1064 = vadd.f32 %v967, %v1063
    %v1065 = vpop.f32.mrf.mxu0
    %v1066 = vpop.f32.mrf.mxu0
    %v1067 = vadd.f32 %v970, %v1066
    %v1068 = vpop.f32.mrf.mxu0
    %1069 = vmatprep.mubr.bf16.mxu0 %v639
    %1070 = vmatmul.mubr.bf16.gmra.mxu0 %v638
    %v1071 = vpop.f32.mrf.mxu0
    %v1072 = vadd.f32 %v975, %v1071
    %v1073 = vpop.f32.mrf.mxu0
    %v1074 = vpop.f32.mrf.mxu0
    %v1075 = vadd.f32 %v978, %v1074
    %v1076 = vpop.f32.mrf.mxu0
    %1077 = vmatprep.mubr.bf16.mxu0 %v643
    %1078 = vmatmul.mubr.bf16.gmra.mxu0 %v642
    %v1079 = vpop.f32.mrf.mxu0
    %v1080 = vadd.f32 %v983, %v1079
    %v1081 = vpop.f32.mrf.mxu0
    %v1082 = vpop.f32.mrf.mxu0
    %v1083 = vadd.f32 %v986, %v1082
    %v1084 = vpop.f32.mrf.mxu0
    %1085 = vmatprep.mubr.bf16.mxu0 %v647
    %1086 = vmatmul.mubr.bf16.gmra.mxu0 %v646
    %v1087 = vpop.f32.mrf.mxu0
    %v1088 = vadd.f32 %v991, %v1087
    %v1089 = vpop.f32.mrf.mxu0
    %v1090 = vpop.f32.mrf.mxu0
    %v1091 = vadd.f32 %v994, %v1090
    %v1092 = vpop.f32.mrf.mxu0
    %1093 = vmatprep.mubr.bf16.mxu0 %v651
    %1094 = vmatmul.mubr.bf16.gmra.mxu0 %v650
    %v1095 = vpop.f32.mrf.mxu0
    %v1096 = vadd.f32 %v999, %v1095
    %v1097 = vpop.f32.mrf.mxu0
    %v1098 = vpop.f32.mrf.mxu0
    %v1099 = vadd.f32 %v1002, %v1098
    %v1100 = vpop.f32.mrf.mxu0
    %1101 = vdwg.mxu0
    %s1102 = sld [smem:[#allocation2]]
    %v1103 = vstv %s1102
    %v1104 = vadd.f32 %v1040, %v1103
    %v1105 = vadd.f32 %v1043, %v1103
    %v1106 = vadd.f32 %v1048, %v1103
    %v1107 = vadd.f32 %v1051, %v1103
    %v1108 = vadd.f32 %v1056, %v1103
    %v1109 = vadd.f32 %v1059, %v1103
    %v1110 = vadd.f32 %v1064, %v1103
    %v1111 = vadd.f32 %v1067, %v1103
    %v1112 = vadd.f32 %v1072, %v1103
    %v1113 = vadd.f32 %v1075, %v1103
    %v1114 = vadd.f32 %v1080, %v1103
    %v1115 = vadd.f32 %v1083, %v1103
    %v1116 = vadd.f32 %v1088, %v1103
    %v1117 = vadd.f32 %v1091, %v1103
    %v1118 = vadd.f32 %v1096, %v1103
    %v1119 = vadd.f32 %v1099, %v1103
    %1136 = vset.pattern.permute.xlu0 0
    %1137 = vperm.xlu0 %1136, %v1104
    %v1138 = vpop.permute.xlu0 %1137
    %1139 = vset.pattern.permute.xlu0 0
    %1140 = vperm.xlu0 %1139, %v1105
    %v1141 = vpop.permute.xlu0 %1140
    %1142 = vset.pattern.permute.xlu0 0
    %1143 = vperm.xlu0 %1142, %v1106
    %v1144 = vpop.permute.xlu0 %1143
    %1145 = vset.pattern.permute.xlu0 0
    %1146 = vperm.xlu0 %1145, %v1107
    %v1147 = vpop.permute.xlu0 %1146
    %1148 = vset.pattern.permute.xlu0 0
    %1149 = vperm.xlu0 %1148, %v1108
    %v1150 = vpop.permute.xlu0 %1149
    %1151 = vset.pattern.permute.xlu0 0
    %1152 = vperm.xlu0 %1151, %v1109
    %v1153 = vpop.permute.xlu0 %1152
    %1154 = vset.pattern.permute.xlu0 0
    %1155 = vperm.xlu0 %1154, %v1110
    %v1156 = vpop.permute.xlu0 %1155
    %1157 = vset.pattern.permute.xlu0 0
    %1158 = vperm.xlu0 %1157, %v1111
    %v1159 = vpop.permute.xlu0 %1158
    %1160 = vset.pattern.permute.xlu0 0
    %1161 = vperm.xlu0 %1160, %v1112
    %v1162 = vpop.permute.xlu0 %1161
    %1163 = vset.pattern.permute.xlu0 0
    %1164 = vperm.xlu0 %1163, %v1113
    %v1165 = vpop.permute.xlu0 %1164
    %1166 = vset.pattern.permute.xlu0 0
    %1167 = vperm.xlu0 %1166, %v1114
    %v1168 = vpop.permute.xlu0 %1167
    %1169 = vset.pattern.permute.xlu0 0
    %1170 = vperm.xlu0 %1169, %v1115
    %v1171 = vpop.permute.xlu0 %1170
    %1172 = vset.pattern.permute.xlu0 0
    %1173 = vperm.xlu0 %1172, %v1116
    %v1174 = vpop.permute.xlu0 %1173
    %1175 = vset.pattern.permute.xlu0 0
    %1176 = vperm.xlu0 %1175, %v1117
    %v1177 = vpop.permute.xlu0 %1176
    %1178 = vset.pattern.permute.xlu0 0
    %1179 = vperm.xlu0 %1178, %v1118
    %v1180 = vpop.permute.xlu0 %1179
    %1181 = vset.pattern.permute.xlu0 0
    %1182 = vperm.xlu0 %1181, %v1119
    %v1183 = vpop.permute.xlu0 %1182
    %v1184 = vlaneseq
    %v1185 = vand.u32 %v1184, 127
    %v1186 = vlaneseq
    %v1187 = vshrl.u32 %v1186, 7
    %v1188 = vsub.s32 %v1185, %v1187
    %v1189 = vrot.slane %v1138, %v1188
    %v1190 = vadd.s32 %v1185, 4294967288
    %v1191 = vlaneseq
    %v1192 = vshrl.u32 %v1191, 7
    %v1193 = vsub.s32 %v1190, %v1192
    %v1194 = vrot.slane %v1141, %v1193
    %vm1195 = vcmask 130112
    %v1196 = vsel %vm1195, %v1194, %v1189
    %v1197 = vadd.s32 %v1185, 4294967280
    %v1198 = vlaneseq
    %v1199 = vshrl.u32 %v1198, 7
    %v1200 = vsub.s32 %v1197, %v1199
    %v1201 = vrot.slane %v1144, %v1200
    %vm1202 = vcmask 195712
    %v1203 = vsel %vm1202, %v1201, %v1196
    %v1204 = vadd.s32 %v1185, 4294967272
    %v1205 = vlaneseq
    %v1206 = vshrl.u32 %v1205, 7
    %v1207 = vsub.s32 %v1204, %v1206
    %v1208 = vrot.slane %v1147, %v1207
    %vm1209 = vcmask 261312
    %v1210 = vsel %vm1209, %v1208, %v1203
    %v1211 = vadd.s32 %v1185, 4294967264
    %v1212 = vlaneseq
    %v1213 = vshrl.u32 %v1212, 7
    %v1214 = vsub.s32 %v1211, %v1213
    %v1215 = vrot.slane %v1150, %v1214
    %vm1216 = vcmask 326912
    %v1217 = vsel %vm1216, %v1215, %v1210
    %v1218 = vadd.s32 %v1185, 4294967256
    %v1219 = vlaneseq
    %v1220 = vshrl.u32 %v1219, 7
    %v1221 = vsub.s32 %v1218, %v1220
    %v1222 = vrot.slane %v1153, %v1221
    %vm1223 = vcmask 392512
    %v1224 = vsel %vm1223, %v1222, %v1217
    %v1225 = vadd.s32 %v1185, 4294967248
    %v1226 = vlaneseq
    %v1227 = vshrl.u32 %v1226, 7
    %v1228 = vsub.s32 %v1225, %v1227
    %v1229 = vrot.slane %v1156, %v1228
    %vm1230 = vcmask 458112
    %v1231 = vsel %vm1230, %v1229, %v1224
    %v1232 = vadd.s32 %v1185, 4294967240
    %v1233 = vlaneseq
    %v1234 = vshrl.u32 %v1233, 7
    %v1235 = vsub.s32 %v1232, %v1234
    %v1236 = vrot.slane %v1159, %v1235
    %vm1237 = vcmask 523712
    %v1238 = vsel %vm1237, %v1236, %v1231
    %v1239 = vadd.s32 %v1185, 4294967232
    %v1240 = vlaneseq
    %v1241 = vshrl.u32 %v1240, 7
    %v1242 = vsub.s32 %v1239, %v1241
    %v1243 = vrot.slane %v1162, %v1242
    %vm1244 = vcmask 589312
    %v1245 = vsel %vm1244, %v1243, %v1238
    %v1246 = vadd.s32 %v1185, 4294967224
    %v1247 = vlaneseq
    %v1248 = vshrl.u32 %v1247, 7
    %v1249 = vsub.s32 %v1246, %v1248
    %v1250 = vrot.slane %v1165, %v1249
    %vm1251 = vcmask 654912
    %v1252 = vsel %vm1251, %v1250, %v1245
    %v1253 = vadd.s32 %v1185, 4294967216
    %v1254 = vlaneseq
    %v1255 = vshrl.u32 %v1254, 7
    %v1256 = vsub.s32 %v1253, %v1255
    %v1257 = vrot.slane %v1168, %v1256
    %vm1258 = vcmask 720512
    %v1259 = vsel %vm1258, %v1257, %v1252
    %v1260 = vadd.s32 %v1185, 4294967208
    %v1261 = vlaneseq
    %v1262 = vshrl.u32 %v1261, 7
    %v1263 = vsub.s32 %v1260, %v1262
    %v1264 = vrot.slane %v1171, %v1263
    %vm1265 = vcmask 786112
    %v1266 = vsel %vm1265, %v1264, %v1259
    %v1267 = vadd.s32 %v1185, 4294967200
    %v1268 = vlaneseq
    %v1269 = vshrl.u32 %v1268, 7
    %v1270 = vsub.s32 %v1267, %v1269
    %v1271 = vrot.slane %v1174, %v1270
    %vm1272 = vcmask 851712
    %v1273 = vsel %vm1272, %v1271, %v1266
    %v1274 = vadd.s32 %v1185, 4294967192
    %v1275 = vlaneseq
    %v1276 = vshrl.u32 %v1275, 7
    %v1277 = vsub.s32 %v1274, %v1276
    %v1278 = vrot.slane %v1177, %v1277
    %vm1279 = vcmask 917312
    %v1280 = vsel %vm1279, %v1278, %v1273
    %v1281 = vadd.s32 %v1185, 4294967184
    %v1282 = vlaneseq
    %v1283 = vshrl.u32 %v1282, 7
    %v1284 = vsub.s32 %v1281, %v1283
    %v1285 = vrot.slane %v1180, %v1284
    %vm1286 = vcmask 982912
    %v1287 = vsel %vm1286, %v1285, %v1280
    %v1288 = vadd.s32 %v1185, 4294967176
    %v1289 = vlaneseq
    %v1290 = vshrl.u32 %v1289, 7
    %v1291 = vsub.s32 %v1288, %v1290
    %v1292 = vrot.slane %v1183, %v1291
    %vm1293 = vcmask 1048512
    %v1294 = vsel %vm1293, %v1292, %v1287
    %1296 = vst [vmem:[#allocation11] sm:$0x1] %v1294
    // Predicated region
    $region38: #{tpu_custom_call.1} parent=1 // pred_check
      _
    $region39: #{tpu_custom_call.1} parent=1 // pred_check_branch
      %1298 = sbr.rel (0) target = $region41
    $region40: #{tpu_custom_call.1} parent=1 // pred_region
      %s1300 = ssub.s32 16, 16
      %1301 = vsyncadd [#allocation5], %s1300
      %s1303 = sshll.u32 [#allocation11], 4
      %s1304 = int_to_ptr.vmem [resolvable:$true] %s1303
      %1306 = dma.vmem_to_hbm [thread:$0]  %s1304, 16, %s5, [#allocation5]
    $region41: #{tpu_custom_call.1} parent=1 // pred_fallthru
      _
    // Predicated region
    $region42: #{tpu_custom_call.1} parent=1 // pred_check
      _
    $region43: #{tpu_custom_call.1} parent=1 // pred_check_branch
      %1308 = sbr.rel (0) target = $region45
    $region44: #{tpu_custom_call.1} parent=1 // pred_region
      %1309 = dma.done [#allocation5], 16
    $region45: #{tpu_custom_call.1} parent=1 // pred_fallthru
      _
    %1310 = vsyncpa [#allocation4], 1
    %1311 = vsyncpa [#allocation7], 1
    %1312 = vsyncpa [#allocation10], 1
    %1313 = vsyncpa [#allocation5], 1

</llo_original>
